<compile_context>
chip_gen: v7x
topology: tpu7x:2x2x1
jax: 0.10.0
libtpu: 0.0.40
codegen_flags: <defaults>
</compile_context>

<pallas_src>
import functools

import jax
import jax.numpy as jnp
from jax.experimental import pallas as pl
from jax.experimental.pallas import tpu as pltpu

_EPS = 1e-5
_LANE = 128
_SUBLANE = 8
_MiB = 1024 * 1024


def _round_up(v, m):
    return (v + m - 1) // m * m


def _round_down(v, m):
    return v // m * m


def _tpu_info():
    """Best-effort (vmem_capacity_bytes, looks_like_v7x)."""
    vmem_cap = 128 * _MiB
    is_v7 = False
    try:
        vmem_cap = int(pltpu.get_tpu_info().vmem_capacity_bytes)
    except Exception:
        pass
    try:
        kind = jax.devices()[0].device_kind.lower()
        is_v7 = "v7" in kind
    except Exception:
        pass
    # 64 MiB per-core VMEM is also a strong v7x signal.
    if vmem_cap <= 80 * _MiB:
        is_v7 = True
    return vmem_cap, is_v7


# --------------------------------------------------------------------------
# Single-pass kernel: full N rows of one feature slab resident in VMEM.
# --------------------------------------------------------------------------
def _fused_kernel(idx_ref, x_ref, p_ref, o_ref, *, use_mxu):
    # idx_ref : SMEM int32[1]    -- split index (number of user rows)
    # x_ref   : VMEM [N, TF]     -- one feature slab of the input
    # p_ref   : VMEM f32[4, TF]  -- [gamma_u; beta_u; gamma_i; beta_i]
    # o_ref   : VMEM [N, TF]
    idx = idx_ref[0]
    x = x_ref[...].astype(jnp.float32)
    n = x.shape[0]

    row = jax.lax.broadcasted_iota(jnp.int32, (n, 1), 0)
    is_user = row < idx  # (N, 1); broadcasts along lanes

    # NOTE: max(., 1) keeps an empty split finite; PyTorch would raise instead.
    inv_u = 1.0 / jnp.maximum(idx, 1).astype(jnp.float32)
    inv_i = 1.0 / jnp.maximum(n - idx, 1).astype(jnp.float32)

    if use_mxu:
        # v7x: HBM BW is high enough that the VPU is the likely binding unit;
        # push the axis-0 reductions onto the (otherwise idle) MXU.
        # op row 0 = ones -> total sums; row 1 = user mask -> user sums.
        sel = jax.lax.broadcasted_iota(jnp.int32, (2, n), 0)
        col = jax.lax.broadcasted_iota(jnp.int32, (2, n), 1)
        op = jnp.where((sel == 0) | (col < idx), 1.0, 0.0).astype(jnp.float32)

        def _reduce(v):
            s = jnp.dot(op, v, preferred_element_type=jnp.float32,
                        precision=jax.lax.Precision.HIGHEST)
            return s[0:1, :], s[1:2, :]

        sum_tot, sum_u = _reduce(x)
    else:
        sum_tot = jnp.sum(x, axis=0, keepdims=True)
        sum_u = jnp.sum(jnp.where(is_user, x, 0.0), axis=0, keepdims=True)

    mean_u = sum_u * inv_u
    mean_i = (sum_tot - sum_u) * inv_i

    # Centered (two-pass, biased) variance: one shared centered square, item
    # sums obtained by subtraction (no second masked pass).
    d = x - jnp.where(is_user, mean_u, mean_i)
    sq = d * d
    if use_mxu:
        sq_tot, sq_u = _reduce(sq)
    else:
        sq_tot = jnp.sum(sq, axis=0, keepdims=True)
        sq_u = jnp.sum(jnp.where(is_user, sq, 0.0), axis=0, keepdims=True)
    var_u = sq_u * inv_u
    var_i = (sq_tot - sq_u) * inv_i

    # Fused affine epilogue y = x * scale_sel + bias_sel; `d` does not stay
    # live through the store (lower VMEM/vreg pressure at large tiles).
    scale_u = p_ref[0, :][None, :] * jax.lax.rsqrt(var_u + _EPS)
    scale_i = p_ref[2, :][None, :] * jax.lax.rsqrt(var_i + _EPS)
    bias_u = p_ref[1, :][None, :] - mean_u * scale_u
    bias_i = p_ref[3, :][None, :] - mean_i * scale_i
    scale = jnp.where(is_user, scale_u, scale_i)
    bias = jnp.where(is_user, bias_u, bias_i)
    o_ref[...] = (x * scale + bias).astype(o_ref.dtype)


# --------------------------------------------------------------------------
# Two-stage fallback for large N (full-N slab does not fit in VMEM).
# --------------------------------------------------------------------------
def _stats_kernel(idx_ref, x_ref, s_ref, *, n_total, tile_n):
    # Accumulate per-feature raw moments over row blocks.  Row axis is the
    # last ("arbitrary") grid axis; the (4, TF) output block stays resident.
    j = pl.program_id(1)

    @pl.when(j == 0)
    def _():
        s_ref[...] = jnp.zeros_like(s_ref)

    idx = idx_ref[0]
    x = x_ref[...].astype(jnp.float32)
    tn = x.shape[0]
    row = j * tile_n + jax.lax.broadcasted_iota(jnp.int32, (tn, 1), 0)
    valid = row < n_total                      # mask ragged last row block
    is_user = jnp.logical_and(valid, row < idx)

    xv = jnp.where(valid, x, 0.0)
    xu = jnp.where(is_user, x, 0.0)
    sq = xv * xv
    squ = jnp.where(is_user, sq, 0.0)
    s_ref[...] += jnp.concatenate(
        [jnp.sum(xv, axis=0, keepdims=True),
         jnp.sum(xu, axis=0, keepdims=True),
         jnp.sum(sq, axis=0, keepdims=True),
         jnp.sum(squ, axis=0, keepdims=True)], axis=0)


def _apply_kernel(idx_ref, x_ref, p_ref, o_ref, *, tile_n):
    # p_ref rows: [scale_u; bias_u; scale_i; bias_i]
    j = pl.program_id(1)
    idx = idx_ref[0]
    tn = x_ref.shape[0]
    row = j * tile_n + jax.lax.broadcasted_iota(jnp.int32, (tn, 1), 0)
    is_user = row < idx
    scale = jnp.where(is_user, p_ref[0, :][None, :], p_ref[2, :][None, :])
    bias = jnp.where(is_user, p_ref[1, :][None, :], p_ref[3, :][None, :])
    o_ref[...] = (x_ref[...].astype(jnp.float32) * scale + bias).astype(o_ref.dtype)


# --------------------------------------------------------------------------
# Wrapper
# --------------------------------------------------------------------------
def bipartite_norm(x, gamma_user, beta_user, gamma_item, beta_item, index,
                   *, vmem_budget_bytes=None, force_two_stage=False):
    """x: [N, F] (users first, then items); gamma_*/beta_*: [F]; index: int."""
    n, f = x.shape
    # Clamp index to [0, N]; PyTorch would raise on an empty split.
    index = int(min(max(int(index), 0), n))

    vmem_cap, is_v7 = _tpu_info()
    if vmem_budget_bytes is None:
        # ~75% of physical VMEM: ~96 MiB on v5e/v6e (128 MiB), ~48 MiB on v7x.
        vmem_budget_bytes = (vmem_cap // 4) * 3
    vmem_hard_cap = max(32 * _MiB, (vmem_cap // 8) * 7)  # 112 MiB / 56 MiB clamp

    idx_arr = jnp.asarray([index], dtype=jnp.int32)

    # ~7 live (N, tile_f) f32 blocks in the single-pass kernel: 2x in + 2x out
    # double buffers plus in-kernel temporaries (x f32 copy, d, sq / masks).
    live_blocks = 7
    min_tile_f = f if f <= _LANE else _LANE
    single_pass_bytes = live_blocks * n * 4 * min_tile_f
    use_single_pass = (not force_two_stage) and single_pass_bytes <= vmem_budget_bytes

    if use_single_pass:
        if f <= _LANE:
            tile_f = f                         # block == full dim (no pad needed)
        else:
            by_target = _round_down(max((4 * _MiB) // (n * 4), _LANE), _LANE)
            by_vmem = _round_down(
                max(vmem_budget_bytes // (live_blocks * n * 4), _LANE), _LANE)
            tile_f = max(_LANE, min(by_target, by_vmem, _round_down(f, _LANE)))
            if is_v7:
                # Guarantee >= 2 feature blocks so the "parallel" axis can
                # shard across both v7x TensorCores.
                tile_f = min(tile_f, max(_LANE, _round_up(pl.cdiv(f, 2), _LANE)))
                tile_f = min(tile_f, _round_down(f, _LANE))
        grid_f = pl.cdiv(f, tile_f)

        params = jnp.stack([gamma_user, beta_user, gamma_item, beta_item],
                           axis=0).astype(jnp.float32)

        vmem_needed = live_blocks * n * tile_f * 4 + 2 * 4 * tile_f * 4 + 2 * _MiB
        vmem_limit = int(min(max(vmem_needed, 32 * _MiB), vmem_hard_cap))

        return pl.pallas_call(
            functools.partial(_fused_kernel, use_mxu=is_v7),
            out_shape=jax.ShapeDtypeStruct((n, f), x.dtype),
            grid_spec=pltpu.PrefetchScalarGridSpec(
                num_scalar_prefetch=1,
                grid=(grid_f,),
                in_specs=[
                    pl.BlockSpec((n, tile_f), lambda i, idx: (0, i)),
                    pl.BlockSpec((4, tile_f), lambda i, idx: (0, i)),
                ],
                out_specs=pl.BlockSpec((n, tile_f), lambda i, idx: (0, i)),
            ),
            compiler_params=pltpu.CompilerParams(
                dimension_semantics=("parallel",),
                vmem_limit_bytes=vmem_limit,
            ),
        )(idx_arr, x, params)

    # ---- two-stage large-N path --------------------------------------------
    # Stage A: raw-moment accumulation (sum, masked sum, sq sum, masked sq sum)
    # over row blocks into a (4, F) stats array; Stage B: fused affine apply.
    # NOTE: raw-moment variance (E[x^2] - mean^2) can lose precision vs. the
    # centered two-pass form used by the single-pass kernel; acceptable here.
    if f <= _LANE:
        tile_f = f
    else:
        tile_f = max(_LANE, min(_round_down(f, _LANE), 512))
    per_row_bytes = tile_f * 4
    by_target = max(_SUBLANE, (2 * _MiB) // per_row_bytes)
    by_vmem = max(_SUBLANE, vmem_budget_bytes // (6 * per_row_bytes))
    tile_n = max(_SUBLANE,
                 _round_down(min(by_target, by_vmem, max(n, _SUBLANE)), _SUBLANE))
    tile_n = min(tile_n, max(_SUBLANE, _round_down(n, _SUBLANE)))
    grid_f = pl.cdiv(f, tile_f)
    grid_n = pl.cdiv(n, tile_n)

    block_bytes = tile_n * tile_f * 4
    vmem_limit_a = int(min(max(6 * block_bytes + 2 * 4 * tile_f * 4 + 2 * _MiB,
                               32 * _MiB), vmem_hard_cap))
    vmem_limit_b = int(min(max(6 * block_bytes + 2 * 4 * tile_f * 4 + 2 * _MiB,
                               32 * _MiB), vmem_hard_cap))

    stats = pl.pallas_call(
        functools.partial(_stats_kernel, n_total=n, tile_n=tile_n),
        out_shape=jax.ShapeDtypeStruct((4, f), jnp.float32),
        grid_spec=pltpu.PrefetchScalarGridSpec(
            num_scalar_prefetch=1,
            grid=(grid_f, grid_n),
            in_specs=[pl.BlockSpec((tile_n, tile_f), lambda i, j, idx: (j, i))],
            out_specs=pl.BlockSpec((4, tile_f), lambda i, j, idx: (0, i)),
        ),
        compiler_params=pltpu.CompilerParams(
            dimension_semantics=("parallel", "arbitrary"),
            vmem_limit_bytes=vmem_limit_a,
        ),
    )(idx_arr, x)

    # Tiny (F,)-sized per-feature scale/bias math stays in plain JAX.
    cnt_u = float(max(index, 1))
    cnt_i = float(max(n - index, 1))
    sum_tot, sum_u, sq_tot, sq_u = stats[0], stats[1], stats[2], stats[3]
    mean_u = sum_u / cnt_u
    mean_i = (sum_tot - sum_u) / cnt_i
    var_u = jnp.maximum(sq_u / cnt_u - mean_u * mean_u, 0.0)
    var_i = jnp.maximum((sq_tot - sq_u) / cnt_i - mean_i * mean_i, 0.0)
    scale_u = gamma_user.astype(jnp.float32) * jax.lax.rsqrt(var_u + _EPS)
    scale_i = gamma_item.astype(jnp.float32) * jax.lax.rsqrt(var_i + _EPS)
    bias_u = beta_user.astype(jnp.float32) - mean_u * scale_u
    bias_i = beta_item.astype(jnp.float32) - mean_i * scale_i
    affine = jnp.stack([scale_u, bias_u, scale_i, bias_i], axis=0)

    return pl.pallas_call(
        functools.partial(_apply_kernel, tile_n=tile_n),
        out_shape=jax.ShapeDtypeStruct((n, f), x.dtype),
        grid_spec=pltpu.PrefetchScalarGridSpec(
            num_scalar_prefetch=1,
            grid=(grid_f, grid_n),
            in_specs=[
                pl.BlockSpec((tile_n, tile_f), lambda i, j, idx: (j, i)),
                pl.BlockSpec((4, tile_f), lambda i, j, idx: (0, i)),
            ],
            out_specs=pl.BlockSpec((tile_n, tile_f), lambda i, j, idx: (j, i)),
        ),
        compiler_params=pltpu.CompilerParams(
            dimension_semantics=("parallel", "parallel"),
            vmem_limit_bytes=vmem_limit_b,
        ),
    )(idx_arr, x, affine)


def _reference(x, gamma_u, beta_u, gamma_i, beta_i, index):
    """Pure-JAX reference mirroring PyTorch BatchNorm1d training forward."""
    def bn(xs, g, b):
        m = jnp.mean(xs, axis=0, keepdims=True)
        v = jnp.mean((xs - m) ** 2, axis=0, keepdims=True)  # biased variance
        return (xs - m) * jax.lax.rsqrt(v + _EPS) * g[None, :] + b[None, :]

    users = bn(x[:index], gamma_u, beta_u)
    items = bn(x[index:], gamma_i, beta_i)
    return jnp.concatenate([users, items], axis=0)


if __name__ == "__main__":
    key = jax.random.PRNGKey(0)

    # --- small test exercising the single-pass fused kernel -----------------
    num_features = 32
    n_users, n_items = 6, 10
    n = n_users + n_items
    kx, kgu, kbu, kgi, kbi = jax.random.split(key, 5)

    x = jax.random.normal(kx, (n, num_features), dtype=jnp.float32)
    gamma_user = 1.0 + 0.1 * jax.random.normal(kgu, (num_features,), jnp.float32)
    beta_user = 0.1 * jax.random.normal(kbu, (num_features,), jnp.float32)
    gamma_item = 1.0 + 0.1 * jax.random.normal(kgi, (num_features,), jnp.float32)
    beta_item = 0.1 * jax.random.normal(kbi, (num_features,), jnp.float32)

    out = bipartite_norm(x, gamma_user, beta_user, gamma_item, beta_item, n_users)
    out = jax.block_until_ready(out)
    ref = _reference(x, gamma_user, beta_user, gamma_item, beta_item, n_users)
    assert out.shape == (n, num_features)
    assert jnp.allclose(out, ref, atol=1e-4, rtol=1e-4), "single-pass mismatch"

    # --- forced two-stage (large-N fallback) path: ragged rows and lanes -----
    n2_users, n2_items, f2 = 17, 19, 160   # N=36 (ragged vs 8), F=160 (ragged vs 128)
    n2 = n2_users + n2_items
    kx2, _ = jax.random.split(kx)
    x2 = jax.random.normal(kx2, (n2, f2), dtype=jnp.float32)
    g_u2 = jnp.ones((f2,), jnp.float32)
    b_u2 = jnp.zeros((f2,), jnp.float32)
    g_i2 = 1.0 + 0.05 * jnp.arange(f2, dtype=jnp.float32) / f2
    b_i2 = 0.01 * jnp.arange(f2, dtype=jnp.float32)

    out2 = bipartite_norm(x2, g_u2, b_u2, g_i2, b_i2, n2_users,
                          force_two_stage=True)
    out2 = jax.block_until_ready(out2)
    ref2 = _reference(x2, g_u2, b_u2, g_i2, b_i2, n2_users)
    assert out2.shape == (n2, f2)
    assert jnp.allclose(out2, ref2, atol=1e-3, rtol=1e-3), "two-stage mismatch"

    print("KERNEL_OK")
</pallas_src>

<mosaic_0001>
module attributes {stable_mosaic.version = 11 : i64} {
  func.func @_fused_kernel(%arg0: i32, %arg1: memref<1xi32, #tpu.memory_space<smem>>, %arg2: memref<16x32xf32, #tpu.memory_space<vmem>>, %arg3: memref<4x32xf32, #tpu.memory_space<vmem>>, %arg4: memref<16x32xf32, #tpu.memory_space<vmem>>) attributes {dimension_semantics = [#tpu.dimension_semantics<parallel>], iteration_bounds = array<i64: 1>, scalar_prefetch = 1 : i64, scratch_operands = 0 : i64, tpu.core_type = #tpu.core_type<tc>, window_params = [{transform_indices = @transform_0, window_bounds = array<i64: 16, 32>}, {transform_indices = @transform_1, window_bounds = array<i64: 4, 32>}, {transform_indices = @transform_2, window_bounds = array<i64: 16, 32>}]} {
    %c0 = arith.constant 0 : index
    %0 = memref.load %arg1[%c0] : memref<1xi32, #tpu.memory_space<smem>>
    %c0_0 = arith.constant 0 : index
    %c0_1 = arith.constant 0 : index
    %1 = vector.load %arg2[%c0_0, %c0_1] : memref<16x32xf32, #tpu.memory_space<vmem>>, vector<16x32xf32>
    %2 = tpu.iota {dimensions = array<i32: 0>} : vector<16x1xi32>
    %3 = vector.broadcast %0 : i32 to vector<16x1xi32>
    %4 = arith.cmpi slt, %2, %3 : vector<16x1xi32>
    %c1_i32 = arith.constant 1 : i32
    %5 = arith.maxsi %0, %c1_i32 : i32
    %6 = arith.sitofp %5 : i32 to f32
    %cst = arith.constant 1.000000e+00 : f32
    %7 = arith.divf %cst, %6 : f32
    %c16_i32 = arith.constant 16 : i32
    %8 = arith.subi %c16_i32, %0 : i32
    %c1_i32_2 = arith.constant 1 : i32
    %9 = arith.maxsi %8, %c1_i32_2 : i32
    %10 = arith.sitofp %9 : i32 to f32
    %cst_3 = arith.constant 1.000000e+00 : f32
    %11 = arith.divf %cst_3, %10 : f32
    %cst_4 = arith.constant dense<0.000000e+00> : vector<32xf32>
    %12 = vector.multi_reduction <add>, %1, %cst_4 [0] : vector<16x32xf32> to vector<32xf32>
    %13 = vector.shape_cast %12 : vector<32xf32> to vector<1x32xf32>
    %cst_5 = arith.constant 0.000000e+00 : f32
    %14 = vector.shape_cast %4 : vector<16x1xi1> to vector<16x1xi1>
    %15 = vector.broadcast %14 : vector<16x1xi1> to vector<16x32xi1>
    %16 = vector.broadcast %cst_5 : f32 to vector<16x32xf32>
    %17 = arith.select %15, %1, %16 : vector<16x32xi1>, vector<16x32xf32>
    %cst_6 = arith.constant dense<0.000000e+00> : vector<32xf32>
    %18 = vector.multi_reduction <add>, %17, %cst_6 [0] : vector<16x32xf32> to vector<32xf32>
    %19 = vector.shape_cast %18 : vector<32xf32> to vector<1x32xf32>
    %20 = vector.broadcast %7 : f32 to vector<1x32xf32>
    %21 = arith.mulf %19, %20 : vector<1x32xf32>
    %22 = arith.subf %13, %19 : vector<1x32xf32>
    %23 = vector.broadcast %11 : f32 to vector<1x32xf32>
    %24 = arith.mulf %22, %23 : vector<1x32xf32>
    %25 = vector.shape_cast %4 : vector<16x1xi1> to vector<16x1xi1>
    %26 = vector.broadcast %25 : vector<16x1xi1> to vector<16x32xi1>
    %27 = vector.shape_cast %21 : vector<1x32xf32> to vector<1x32xf32>
    %28 = vector.broadcast %27 : vector<1x32xf32> to vector<16x32xf32>
    %29 = vector.shape_cast %24 : vector<1x32xf32> to vector<1x32xf32>
    %30 = vector.broadcast %29 : vector<1x32xf32> to vector<16x32xf32>
    %31 = arith.select %26, %28, %30 : vector<16x32xi1>, vector<16x32xf32>
    %32 = arith.subf %1, %31 : vector<16x32xf32>
    %33 = arith.mulf %32, %32 : vector<16x32xf32>
    %cst_7 = arith.constant dense<0.000000e+00> : vector<32xf32>
    %34 = vector.multi_reduction <add>, %33, %cst_7 [0] : vector<16x32xf32> to vector<32xf32>
    %35 = vector.shape_cast %34 : vector<32xf32> to vector<1x32xf32>
    %cst_8 = arith.constant 0.000000e+00 : f32
    %36 = vector.shape_cast %4 : vector<16x1xi1> to vector<16x1xi1>
    %37 = vector.broadcast %36 : vector<16x1xi1> to vector<16x32xi1>
    %38 = vector.broadcast %cst_8 : f32 to vector<16x32xf32>
    %39 = arith.select %37, %33, %38 : vector<16x32xi1>, vector<16x32xf32>
    %cst_9 = arith.constant dense<0.000000e+00> : vector<32xf32>
    %40 = vector.multi_reduction <add>, %39, %cst_9 [0] : vector<16x32xf32> to vector<32xf32>
    %41 = vector.shape_cast %40 : vector<32xf32> to vector<1x32xf32>
    %42 = vector.broadcast %7 : f32 to vector<1x32xf32>
    %43 = arith.mulf %41, %42 : vector<1x32xf32>
    %44 = arith.subf %35, %41 : vector<1x32xf32>
    %45 = vector.broadcast %11 : f32 to vector<1x32xf32>
    %46 = arith.mulf %44, %45 : vector<1x32xf32>
    %c0_10 = arith.constant 0 : index
    %c0_11 = arith.constant 0 : index
    %47 = vector.load %arg3[%c0_10, %c0_11] : memref<4x32xf32, #tpu.memory_space<vmem>>, vector<1x32xf32>
    %48 = vector.shape_cast %47 : vector<1x32xf32> to vector<32xf32>
    %49 = vector.shape_cast %48 : vector<32xf32> to vector<1x32xf32>
    %cst_12 = arith.constant 9.99999974E-6 : f32
    %50 = vector.broadcast %cst_12 : f32 to vector<1x32xf32>
    %51 = arith.addf %43, %50 : vector<1x32xf32>
    %52 = math.rsqrt %51 : vector<1x32xf32>
    %53 = arith.mulf %49, %52 : vector<1x32xf32>
    %c2 = arith.constant 2 : index
    %c0_13 = arith.constant 0 : index
    %54 = vector.load %arg3[%c2, %c0_13] : memref<4x32xf32, #tpu.memory_space<vmem>>, vector<1x32xf32>
    %55 = vector.shape_cast %54 : vector<1x32xf32> to vector<32xf32>
    %56 = vector.shape_cast %55 : vector<32xf32> to vector<1x32xf32>
    %cst_14 = arith.constant 9.99999974E-6 : f32
    %57 = vector.broadcast %cst_14 : f32 to vector<1x32xf32>
    %58 = arith.addf %46, %57 : vector<1x32xf32>
    %59 = math.rsqrt %58 : vector<1x32xf32>
    %60 = arith.mulf %56, %59 : vector<1x32xf32>
    %c1 = arith.constant 1 : index
    %c0_15 = arith.constant 0 : index
    %61 = vector.load %arg3[%c1, %c0_15] : memref<4x32xf32, #tpu.memory_space<vmem>>, vector<1x32xf32>
    %62 = vector.shape_cast %61 : vector<1x32xf32> to vector<32xf32>
    %63 = vector.shape_cast %62 : vector<32xf32> to vector<1x32xf32>
    %64 = arith.mulf %21, %53 : vector<1x32xf32>
    %65 = arith.subf %63, %64 : vector<1x32xf32>
    %c3 = arith.constant 3 : index
    %c0_16 = arith.constant 0 : index
    %66 = vector.load %arg3[%c3, %c0_16] : memref<4x32xf32, #tpu.memory_space<vmem>>, vector<1x32xf32>
    %67 = vector.shape_cast %66 : vector<1x32xf32> to vector<32xf32>
    %68 = vector.shape_cast %67 : vector<32xf32> to vector<1x32xf32>
    %69 = arith.mulf %24, %60 : vector<1x32xf32>
    %70 = arith.subf %68, %69 : vector<1x32xf32>
    %71 = vector.shape_cast %4 : vector<16x1xi1> to vector<16x1xi1>
    %72 = vector.broadcast %71 : vector<16x1xi1> to vector<16x32xi1>
    %73 = vector.shape_cast %53 : vector<1x32xf32> to vector<1x32xf32>
    %74 = vector.broadcast %73 : vector<1x32xf32> to vector<16x32xf32>
    %75 = vector.shape_cast %60 : vector<1x32xf32> to vector<1x32xf32>
    %76 = vector.broadcast %75 : vector<1x32xf32> to vector<16x32xf32>
    %77 = arith.select %72, %74, %76 : vector<16x32xi1>, vector<16x32xf32>
    %78 = vector.shape_cast %4 : vector<16x1xi1> to vector<16x1xi1>
    %79 = vector.broadcast %78 : vector<16x1xi1> to vector<16x32xi1>
    %80 = vector.shape_cast %65 : vector<1x32xf32> to vector<1x32xf32>
    %81 = vector.broadcast %80 : vector<1x32xf32> to vector<16x32xf32>
    %82 = vector.shape_cast %70 : vector<1x32xf32> to vector<1x32xf32>
    %83 = vector.broadcast %82 : vector<1x32xf32> to vector<16x32xf32>
    %84 = arith.select %79, %81, %83 : vector<16x32xi1>, vector<16x32xf32>
    %85 = arith.mulf %1, %77 : vector<16x32xf32>
    %86 = arith.addf %85, %84 : vector<16x32xf32>
    %c0_17 = arith.constant 0 : index
    %c0_18 = arith.constant 0 : index
    %87 = vector.load %arg4[%c0_17, %c0_18] : memref<16x32xf32, #tpu.memory_space<vmem>>, vector<16x32xf32>
    tpu.vector_store %arg4[%c0_17, %c0_18], %86 {strides = array<i32>} : memref<16x32xf32, #tpu.memory_space<vmem>>, vector<16x32xf32>,
    return
  }
  func.func @transform_0(%arg0: i32, %arg1: memref<1xi32, #tpu.memory_space<smem>>) -> (i32, i32) {
    %c0_i32 = arith.constant 0 : i32
    %c0_i32_0 = arith.constant 0 : i32
    return %c0_i32, %arg0 : i32, i32
  }
  func.func @transform_1(%arg0: i32, %arg1: memref<1xi32, #tpu.memory_space<smem>>) -> (i32, i32) {
    %c0_i32 = arith.constant 0 : i32
    %c0_i32_0 = arith.constant 0 : i32
    return %c0_i32, %arg0 : i32, i32
  }
  func.func @transform_2(%arg0: i32, %arg1: memref<1xi32, #tpu.memory_space<smem>>) -> (i32, i32) {
    %c0_i32 = arith.constant 0 : i32
    %c0_i32_0 = arith.constant 0 : i32
    return %c0_i32, %arg0 : i32, i32
  }
}

</mosaic_0001>

<llo_original>
// kernel: tpu_custom_call.1
$region0: #{tpu_custom_call.1}
  #allocation0 [shape = 'u32[]', space=smem, size = 0x4, offset = 0x4, fixed_abs, tag = 'smem constant byte address 0x4 - core index']
  #allocation1 [shape = 'u32[144,128]{1,0:T(1,128)}', space=vmem, size = 0x12000, scoped, tag = 'internal scratch']
  #allocation2 [shape = 's32[1]{0}', space=sflag, size = 0x4, scoped, tag = 'scoped memory for tpu_custom_call.1']
  #allocation3 [shape = 's32[1]{0:T(128)S(6)}', space=smem, size = 0x200, scoped, tag = 'prefetched SMEM operand 0']
  %s0 = inlined_call_operand.<no memory space> [shape: s32[1], index: 0, kind: input, shape index: {}]
  %s1 = inlined_call_operand.hbm [shape: f32[16,32], index: 1, kind: input, shape index: {}]
  %s2 = inlined_call_operand.vmem [shape: f32[4,32], index: 2, kind: input, shape index: {}]
  %s3 = inlined_call_operand.hbm [shape: f32[16,32], index: 3, kind: output, shape index: {}]
  %s4 = sld [smem:[#allocation0]]
  $region22: #{tpu_custom_call.1} parent=0
    _
  %s6 = ssub.s32 1, %s4
  %s7 = scalar_select 0, %s6, %s4
  %8 = sst [smem:[#allocation3]] %s0
  $region1: #{tpu_custom_call.1} parent=0
    #allocation4 [shape = 'u8[8192]{0}', space=vmem, size = 0x2000, scoped, tag = 'input window, operand 1, single buffered']
    #allocation5 [shape = 's32[1]{0}', space=sflag, size = 0x4, scoped, tag = 'scoped memory for tpu_custom_call.1']
    #allocation6 [shape = 's32[1]{0}', space=sflag, size = 0x4, scoped, tag = 'scoped memory for tpu_custom_call.1']
    #allocation7 [shape = 'u8[8192]{0}', space=vmem, size = 0x2000, scoped, tag = 'output window, operand 0, single buffered']
    %9 = vsyncpa [#allocation5], 0
    %10 = vsyncpa [#allocation6], 0
    // Predicated region
    $region2: #{tpu_custom_call.1} parent=1 // pred_check
      _
    $region3: #{tpu_custom_call.1} parent=1 // pred_check_branch
      %12 = sbr.rel (0) target = $region5
    $region4: #{tpu_custom_call.1} parent=1 // pred_region
      %s14 = ssub.s32 256, 256
      %15 = vsyncadd [#allocation5], %s14
      %s16 = sshll.u32 [#allocation4], 4
      %s17 = int_to_ptr.vmem [resolvable:$true] %s16
      %22 = dma.hbm_to_vmem [thread:$0]  %s1, 256, %s17, [#allocation5], 128, 128, 8
    $region5: #{tpu_custom_call.1} parent=1 // pred_fallthru
      _
    // Predicated region
    $region6: #{tpu_custom_call.1} parent=1 // pred_check
      _
    $region7: #{tpu_custom_call.1} parent=1 // pred_check_branch
      %24 = sbr.rel (0) target = $region9
    $region8: #{tpu_custom_call.1} parent=1 // pred_region
      _
    $region9: #{tpu_custom_call.1} parent=1 // pred_fallthru
      _
    // Predicated region
    $region10: #{tpu_custom_call.1} parent=1 // pred_check
      _
    $region11: #{tpu_custom_call.1} parent=1 // pred_check_branch
      %26 = sbr.rel (0) target = $region13
    $region12: #{tpu_custom_call.1} parent=1 // pred_region
      %27 = dma.done [#allocation5], 256
    $region13: #{tpu_custom_call.1} parent=1 // pred_fallthru
      _
    %s28 = sld [smem:[#allocation3]]
    %v29 = vld [vmem:[#allocation4] sm:$0xff]
    %v30 = vld [vmem:[#allocation4 + $0x8] sm:$0xff]
    %v31 = vlaneseq
    %v32 = vshrl.u32 %v31, 7
    %v33 = vadd.s32 %v32, 8
    %v34 = vstv %s28
    %vm35 = vcmp.lt.s32.totalorder %v32, %v34
    %vm36 = vcmp.lt.s32.totalorder %v33, %v34
    %p37 = scmp.gt.s32.totalorder %s28, 1
    %s38 = scalar_select %p37, %s28, 1
    %s39 = scvt.s32.f32 %s38
    %v40 = vstv %s39
    %v41 = vrcp.pop %v40
    %s42 = vtos %v41
    %s43 = ssub.s32 16, %s28
    %p44 = scmp.gt.s32.totalorder %s43, 1
    %s45 = scalar_select %p44, %s43, 1
    %s46 = scvt.s32.f32 %s45
    %v47 = vstv %s46
    %v48 = vrcp.pop %v47
    %s49 = vtos %v48
    %vm50 = vcmask 261120
    %v51 = vsel %vm50, %v29, 0.0
    %v52 = vsel %vm50, %v30, 0.0
    %v53 = vadd.f32 %v51, %v52
    %v54 = vrot.slane %v53, 4
    %v55 = vadd.f32 %v53, %v54
    %v56 = vrot.slane %v55, 2
    %v57 = vadd.f32 %v55, %v56
    %v58 = vrot.slane %v57, 1
    %v59 = vadd.f32 %v57, %v58
    %v60 = vsel %vm35, 1, 0
    %v61 = vsel %vm36, 1, 0
    %vm62 = vcmp.eq.s32.totalorder %v60, 1
    %vm63 = vcmp.eq.s32.totalorder %v61, 1
    %v64 = vsel %vm62, %v29, 0.0
    %v65 = vsel %vm63, %v30, 0.0
    %v66 = vsel %vm50, %v64, 0.0
    %v67 = vsel %vm50, %v65, 0.0
    %v68 = vadd.f32 %v66, %v67
    %v69 = vrot.slane %v68, 4
    %v70 = vadd.f32 %v68, %v69
    %v71 = vrot.slane %v70, 2
    %v72 = vadd.f32 %v70, %v71
    %v73 = vrot.slane %v72, 1
    %v74 = vadd.f32 %v72, %v73
    %v75 = vstv %s42
    %v76 = vmul.f32 %v74, %v75
    %v77 = vsub.f32 %v59, %v74
    %v78 = vstv %s49
    %v79 = vmul.f32 %v77, %v78
    %v80 = vsel %vm62, %v76, %v79
    %v81 = vsel %vm63, %v76, %v79
    %v82 = vsub.f32 %v29, %v80
    %v83 = vsub.f32 %v30, %v81
    %v84 = vmul.f32 %v82, %v82
    %v85 = vmul.f32 %v83, %v83
    %v86 = vsel %vm50, %v84, 0.0
    %v87 = vsel %vm50, %v85, 0.0
    %v88 = vadd.f32 %v86, %v87
    %v89 = vrot.slane %v88, 4
    %v90 = vadd.f32 %v88, %v89
    %v91 = vrot.slane %v90, 2
    %v92 = vadd.f32 %v90, %v91
    %v93 = vrot.slane %v92, 1
    %v94 = vadd.f32 %v92, %v93
    %v95 = vsel %vm62, %v84, 0.0
    %v96 = vsel %vm63, %v85, 0.0
    %v97 = vsel %vm50, %v95, 0.0
    %v98 = vsel %vm50, %v96, 0.0
    %v99 = vadd.f32 %v97, %v98
    %v100 = vrot.slane %v99, 4
    %v101 = vadd.f32 %v99, %v100
    %v102 = vrot.slane %v101, 2
    %v103 = vadd.f32 %v101, %v102
    %v104 = vrot.slane %v103, 1
    %v105 = vadd.f32 %v103, %v104
    %v106 = vmul.f32 %v105, %v75
    %v107 = vsub.f32 %v94, %v105
    %v108 = vmul.f32 %v107, %v78
    %v109 = vld [vmem:[%s2] sm:$0x1]
    %v110 = vadd.f32 %v106, 1e-05
    %v111 = vrsqrt.pop %v110
    %v112 = vmul.f32 %v109, %v111
    %v113 = vld [vmem:[%s2 + $0x2] sm:$0x1]
    %v114 = vadd.f32 %v108, 1e-05
    %v115 = vrsqrt.pop %v114
    %v116 = vmul.f32 %v113, %v115
    %v117 = vld [vmem:[%s2 + $0x1] sm:$0x1]
    %v118 = vmul.f32 %v76, %v112
    %v119 = vsub.f32 %v117, %v118
    %v120 = vld [vmem:[%s2 + $0x3] sm:$0x1]
    %v121 = vmul.f32 %v79, %v116
    %v122 = vsub.f32 %v120, %v121
    %v123 = vlaneseq
    %v124 = vshrl.u32 %v123, 7
    %v125 = vsub.s32 0, %v124
    %v126 = vrot.slane %v112, %v125
    %v127 = vlaneseq
    %v128 = vshrl.u32 %v127, 7
    %v129 = vsub.s32 0, %v128
    %v130 = vrot.slane %v116, %v129
    %v131 = vsel %vm62, %v126, %v130
    %v132 = vsel %vm63, %v126, %v130
    %v133 = vlaneseq
    %v134 = vshrl.u32 %v133, 7
    %v135 = vsub.s32 0, %v134
    %v136 = vrot.slane %v119, %v135
    %v137 = vlaneseq
    %v138 = vshrl.u32 %v137, 7
    %v139 = vsub.s32 0, %v138
    %v140 = vrot.slane %v122, %v139
    %v141 = vsel %vm62, %v136, %v140
    %v142 = vsel %vm63, %v136, %v140
    %v143 = vmul.f32 %v29, %v131
    %v144 = vmul.f32 %v30, %v132
    %v145 = vadd.f32 %v143, %v141
    %v146 = vadd.f32 %v144, %v142
    %147 = vst.msk [vmem:[#allocation7] sm:$0xff] %vm50, %v145
    %148 = vst.msk [vmem:[#allocation7 + $0x8] sm:$0xff] %vm50, %v146
    // Predicated region
    $region14: #{tpu_custom_call.1} parent=1 // pred_check
      _
    $region15: #{tpu_custom_call.1} parent=1 // pred_check_branch
      %150 = sbr.rel (0) target = $region17
    $region16: #{tpu_custom_call.1} parent=1 // pred_region
      %s152 = ssub.s32 256, 256
      %153 = vsyncadd [#allocation6], %s152
      %s154 = sshll.u32 [#allocation7], 4
      %s155 = int_to_ptr.vmem [resolvable:$true] %s154
      %160 = dma.vmem_to_hbm [thread:$0]  %s155, 256, %s3, [#allocation6], 128, 128, 8
    $region17: #{tpu_custom_call.1} parent=1 // pred_fallthru
      _
    // Predicated region
    $region18: #{tpu_custom_call.1} parent=1 // pred_check
      _
    $region19: #{tpu_custom_call.1} parent=1 // pred_check_branch
      %162 = sbr.rel (0) target = $region21
    $region20: #{tpu_custom_call.1} parent=1 // pred_region
      %163 = dma.done [#allocation6], 256
    $region21: #{tpu_custom_call.1} parent=1 // pred_fallthru
      _
    %164 = vsyncpa [#allocation5], 1
    %165 = vsyncpa [#allocation6], 1

</llo_original>
